<compile_context>
chip_gen: v5e
topology: v5e:2x2
jax: 0.10.0
libtpu: 0.0.40
codegen_flags: <defaults>
</compile_context>

<pallas_src>
import functools

import jax
import jax.numpy as jnp
from jax.experimental import pallas as pl
from jax.experimental.pallas import tpu as pltpu

_SUBLANE = 8
_LANE = 128
_MAX_TILE_ROWS = 1024  # rows of 128 lanes per grid step (~0.5 MiB f32/input/buffer)


def _round_up(a, b):
    return ((a + b - 1) // b) * b


def _iw_bce_kernel(x_ref, y_ref, w_ref, out_ref, acc_ref, *,
                   n_valid, tm, steps, needs_mask):
    """Per-tile stable BCE-with-logits, importance-weighted, partial sums."""
    c = pl.program_id(0)   # megacore split ("parallel")
    i = pl.program_id(1)   # sequential reduction axis ("arbitrary")

    @pl.when(i == 0)
    def _():
        acc_ref[...] = jnp.zeros_like(acc_ref)

    # Upcast in-kernel (keeps HBM traffic at the inputs' native width).
    x = x_ref[...].astype(jnp.float32)
    y = y_ref[...].astype(jnp.float32)
    w = w_ref[...].astype(jnp.float32)

    # Numerically stable BCEWithLogits (matches PyTorch):
    #   max(x, 0) - x*y + log(1 + exp(-|x|))
    bce = jnp.maximum(x, 0.0) - x * y + jnp.log1p(jnp.exp(-jnp.abs(x)))
    contrib = w * bce

    if needs_mask:
        # Zero contributions from rows/lanes past the real element count
        # (partial tail tile reads undefined data -> must be masked out).
        blk = c * steps + i
        base = blk * (tm * _LANE)
        row = jax.lax.broadcasted_iota(jnp.int32, (tm, _LANE), 0)
        lane = jax.lax.broadcasted_iota(jnp.int32, (tm, _LANE), 1)
        elem = base + row * _LANE + lane
        contrib = jnp.where(elem < n_valid, contrib, 0.0)

    # Pure VPU vreg adds: fold (tm,128) into the (8,128) accumulator.
    acc_ref[...] += contrib.reshape(-1, _SUBLANE, _LANE).sum(axis=0)

    @pl.when(i == steps - 1)
    def _():
        out_ref[...] = acc_ref[...].reshape(1, _SUBLANE, _LANE)


@jax.jit
def iw_bce_with_logits_loss(logits, masks, iw):
    """JAX/Pallas equivalent of iwBCEWithLogitsLoss.forward."""
    n = logits.size  # static under jit

    if iw.shape != logits.shape:
        # TODO(synk): stream scalar / per-channel iw natively (own BlockSpec or
        # SMEM scalar) instead of materializing a logits-sized broadcast.
        iw = jnp.broadcast_to(iw, logits.shape)

    lane_pad = (-n) % _LANE

    def to2d(a):
        a = a.reshape(-1)
        if lane_pad:
            # Rare path (n % 128 != 0).  Pad values: x=0, y=0, w=0 -> the
            # padded lanes carry weight 0 and contribute nothing.
            a = jnp.pad(a, (0, lane_pad))
        return a.reshape(-1, _LANE)

    # Reshape of contiguous arrays is free (no HBM copy when lane_pad == 0).
    x2d = to2d(logits)
    y2d = to2d(masks)
    w2d = to2d(iw)
    rows = x2d.shape[0]

    # Tile: as large as useful, capped for VMEM (3 MiB double-buffered inputs).
    tm = min(_MAX_TILE_ROWS, _round_up(rows, _SUBLANE))
    n_blocks = pl.cdiv(rows, tm)
    nc = 2 if n_blocks >= 2 else 1            # per-TensorCore partials on v7x
    steps = pl.cdiv(n_blocks, nc)
    needs_mask = (nc * steps * tm) != rows    # any partial/OOB tile at the tail?

    in_spec = pl.BlockSpec((tm, _LANE), lambda c, i: (c * steps + i, 0))
    out_spec = pl.BlockSpec((1, _SUBLANE, _LANE), lambda c, i: (c, 0, 0))

    kernel = functools.partial(
        _iw_bce_kernel, n_valid=n, tm=tm, steps=steps, needs_mask=needs_mask)

    partials = pl.pallas_call(
        kernel,
        out_shape=jax.ShapeDtypeStruct((nc, _SUBLANE, _LANE), jnp.float32),
        grid_spec=pltpu.PrefetchScalarGridSpec(
            num_scalar_prefetch=0,
            grid=(nc, steps),
            in_specs=[in_spec, in_spec, in_spec],
            out_specs=out_spec,
            scratch_shapes=[pltpu.VMEM((_SUBLANE, _LANE), jnp.float32)],
        ),
        compiler_params=pltpu.CompilerParams(
            dimension_semantics=("parallel", "arbitrary")),
    )(x2d, y2d, w2d)

    # Single tiny final reduce + mean outside the kernel.
    return (jnp.sum(partials) / jnp.float32(n)).astype(jnp.float32)


def _reference(logits, masks, iw):
    x = logits.astype(jnp.float32)
    y = masks.astype(jnp.float32)
    bce = jnp.maximum(x, 0.0) - x * y + jnp.log1p(jnp.exp(-jnp.abs(x)))
    return jnp.mean(iw.astype(jnp.float32) * bce)


if __name__ == "__main__":
    key = jax.random.PRNGKey(0)
    k1, k2, k3 = jax.random.split(key, 3)

    # Small NCHW shapes consistent with a segmentation-style BCE loss.
    N, C, H, W = 2, 4, 16, 16
    logits = jax.random.normal(k1, (N, C, H, W), dtype=jnp.float32)
    masks = (jax.random.uniform(k2, (N, C, H, W)) > 0.5).astype(jnp.float32)
    iw = jax.random.uniform(k3, (N, C, H, W), dtype=jnp.float32) + 0.5

    out = iw_bce_with_logits_loss(logits, masks, iw)
    jax.block_until_ready(out)
    ref = _reference(logits, masks, iw)
    assert jnp.allclose(out, ref, atol=1e-5, rtol=1e-4), (out, ref)

    # Secondary check: exercises the multi-block / megacore-split / masked-tail
    # path (rows not a multiple of the tile).
    s1, s2, s3 = jax.random.split(jax.random.PRNGKey(1), 3)
    shp = (1, 1, 1030, 128)
    logits2 = jax.random.normal(s1, shp, dtype=jnp.float32)
    masks2 = (jax.random.uniform(s2, shp) > 0.5).astype(jnp.float32)
    iw2 = jax.random.uniform(s3, shp, dtype=jnp.float32) + 0.5
    out2 = iw_bce_with_logits_loss(logits2, masks2, iw2)
    jax.block_until_ready(out2)
    ref2 = _reference(logits2, masks2, iw2)
    assert jnp.allclose(out2, ref2, atol=1e-5, rtol=1e-4), (out2, ref2)

    print("KERNEL_OK")
</pallas_src>

<mosaic_0001>
module attributes {stable_mosaic.version = 11 : i64} {
  func.func @_iw_bce_kernel(%arg0: i32, %arg1: i32, %arg2: memref<16x128xf32, #tpu.memory_space<vmem>>, %arg3: memref<16x128xf32, #tpu.memory_space<vmem>>, %arg4: memref<16x128xf32, #tpu.memory_space<vmem>>, %arg5: memref<1x8x128xf32, #tpu.memory_space<vmem>>, %arg6: memref<8x128xf32, #tpu.memory_space<vmem>>) attributes {dimension_semantics = [#tpu.dimension_semantics<parallel>, #tpu.dimension_semantics<arbitrary>], iteration_bounds = array<i64: 1, 1>, scalar_prefetch = 0 : i64, scratch_operands = 1 : i64, tpu.core_type = #tpu.core_type<tc>, window_params = [{transform_indices = @transform_0, window_bounds = array<i64: 16, 128>}, {transform_indices = @transform_1, window_bounds = array<i64: 16, 128>}, {transform_indices = @transform_2, window_bounds = array<i64: 16, 128>}, {transform_indices = @transform_3, window_bounds = array<i64: 1, 8, 128>}]} {
    %c0_i32 = arith.constant 0 : i32
    %0 = arith.cmpi eq, %arg1, %c0_i32 : i32
    %1 = arith.extui %0 : i1 to i32
    %c0_i32_0 = arith.constant 0 : i32
    %2 = arith.cmpi ne, %1, %c0_i32_0 : i32
    scf.if %2 {
      %cst_14 = arith.constant 0.000000e+00 : f32
      %25 = vector.broadcast %cst_14 : f32 to vector<8x128xf32>
      %c0_15 = arith.constant 0 : index
      %c0_16 = arith.constant 0 : index
      %26 = vector.load %arg6[%c0_15, %c0_16] : memref<8x128xf32, #tpu.memory_space<vmem>>, vector<8x128xf32>
      tpu.vector_store %arg6[%c0_15, %c0_16], %25 {strides = array<i32>} : memref<8x128xf32, #tpu.memory_space<vmem>>, vector<8x128xf32>,
    } else {
    }
    %c0 = arith.constant 0 : index
    %c0_1 = arith.constant 0 : index
    %3 = vector.load %arg2[%c0, %c0_1] : memref<16x128xf32, #tpu.memory_space<vmem>>, vector<16x128xf32>
    %c0_2 = arith.constant 0 : index
    %c0_3 = arith.constant 0 : index
    %4 = vector.load %arg3[%c0_2, %c0_3] : memref<16x128xf32, #tpu.memory_space<vmem>>, vector<16x128xf32>
    %c0_4 = arith.constant 0 : index
    %c0_5 = arith.constant 0 : index
    %5 = vector.load %arg4[%c0_4, %c0_5] : memref<16x128xf32, #tpu.memory_space<vmem>>, vector<16x128xf32>
    %cst = arith.constant 0.000000e+00 : f32
    %6 = vector.broadcast %cst : f32 to vector<16x128xf32>
    %7 = arith.maximumf %3, %6 : vector<16x128xf32>
    %8 = arith.mulf %3, %4 : vector<16x128xf32>
    %9 = arith.subf %7, %8 : vector<16x128xf32>
    %10 = math.absf %3 : vector<16x128xf32>
    %cst_6 = arith.constant 0.000000e+00 : f32
    %11 = vector.broadcast %cst_6 : f32 to vector<16x128xf32>
    %12 = arith.subf %11, %10 : vector<16x128xf32>
    %13 = math.exp %12 : vector<16x128xf32>
    %14 = math.log1p %13 : vector<16x128xf32>
    %15 = arith.addf %9, %14 : vector<16x128xf32>
    %16 = arith.mulf %5, %15 : vector<16x128xf32>
    %c0_7 = arith.constant 0 : index
    %c0_8 = arith.constant 0 : index
    %17 = vector.load %arg6[%c0_7, %c0_8] : memref<8x128xf32, #tpu.memory_space<vmem>>, vector<8x128xf32>
    %18 = vector.shape_cast %16 : vector<16x128xf32> to vector<2x8x128xf32>
    %cst_9 = arith.constant dense<0.000000e+00> : vector<8x128xf32>
    %19 = vector.multi_reduction <add>, %18, %cst_9 [0] : vector<2x8x128xf32> to vector<8x128xf32>
    %20 = arith.addf %17, %19 : vector<8x128xf32>
    %c0_10 = arith.constant 0 : index
    %c0_11 = arith.constant 0 : index
    %21 = vector.load %arg6[%c0_10, %c0_11] : memref<8x128xf32, #tpu.memory_space<vmem>>, vector<8x128xf32>
    tpu.vector_store %arg6[%c0_10, %c0_11], %20 {strides = array<i32>} : memref<8x128xf32, #tpu.memory_space<vmem>>, vector<8x128xf32>,
    %c0_i32_12 = arith.constant 0 : i32
    %22 = arith.cmpi eq, %arg1, %c0_i32_12 : i32
    %23 = arith.extui %22 : i1 to i32
    %c0_i32_13 = arith.constant 0 : i32
    %24 = arith.cmpi ne, %23, %c0_i32_13 : i32
    scf.if %24 {
      %c0_14 = arith.constant 0 : index
      %c0_15 = arith.constant 0 : index
      %25 = vector.load %arg6[%c0_14, %c0_15] : memref<8x128xf32, #tpu.memory_space<vmem>>, vector<8x128xf32>
      %26 = vector.shape_cast %25 : vector<8x128xf32> to vector<1x8x128xf32>
      %c0_16 = arith.constant 0 : index
      %c0_17 = arith.constant 0 : index
      %c0_18 = arith.constant 0 : index
      %27 = vector.load %arg5[%c0_16, %c0_17, %c0_18] : memref<1x8x128xf32, #tpu.memory_space<vmem>>, vector<1x8x128xf32>
      tpu.vector_store %arg5[%c0_16, %c0_17, %c0_18], %26 {strides = array<i32>} : memref<1x8x128xf32, #tpu.memory_space<vmem>>, vector<1x8x128xf32>,
    } else {
    }
    return
  }
  func.func @transform_0(%arg0: i32, %arg1: i32) -> (i32, i32) {
    %c1_i32 = arith.constant 1 : i32
    %0 = arith.muli %arg0, %c1_i32 : i32
    %1 = arith.addi %0, %arg1 : i32
    %c0_i32 = arith.constant 0 : i32
    %c0_i32_0 = arith.constant 0 : i32
    return %1, %c0_i32 : i32, i32
  }
  func.func @transform_1(%arg0: i32, %arg1: i32) -> (i32, i32) {
    %c1_i32 = arith.constant 1 : i32
    %0 = arith.muli %arg0, %c1_i32 : i32
    %1 = arith.addi %0, %arg1 : i32
    %c0_i32 = arith.constant 0 : i32
    %c0_i32_0 = arith.constant 0 : i32
    return %1, %c0_i32 : i32, i32
  }
  func.func @transform_2(%arg0: i32, %arg1: i32) -> (i32, i32) {
    %c1_i32 = arith.constant 1 : i32
    %0 = arith.muli %arg0, %c1_i32 : i32
    %1 = arith.addi %0, %arg1 : i32
    %c0_i32 = arith.constant 0 : i32
    %c0_i32_0 = arith.constant 0 : i32
    return %1, %c0_i32 : i32, i32
  }
  func.func @transform_3(%arg0: i32, %arg1: i32) -> (i32, i32, i32) {
    %c0_i32 = arith.constant 0 : i32
    %c0_i32_0 = arith.constant 0 : i32
    %c0_i32_1 = arith.constant 0 : i32
    return %arg0, %c0_i32, %c0_i32_0 : i32, i32, i32
  }
}

</mosaic_0001>

<llo_original>
// kernel: iw_bce_with_logits_loss.1
$region0: #{iw_bce_with_logits_loss.1}
  #allocation0 [shape = 'u32[]', space=smem, size = 0x4, offset = 0x4, fixed_abs, tag = 'smem constant byte address 0x4 - core index']
  #allocation1 [shape = 'u32[72,128]{1,0:T(1,128)}', space=vmem, size = 0x9000, scoped, tag = 'internal scratch']
  #allocation2 [shape = 'f32[8,128]{1,0:T(8,128)}', space=vmem, size = 0x1000, scoped, tag = 'scratch operand']
  %s0 = inlined_call_operand.vmem [shape: f32[16,128], index: 0, kind: input, shape index: {}]
  %s1 = inlined_call_operand.vmem [shape: f32[16,128], index: 1, kind: input, shape index: {}]
  %s2 = inlined_call_operand.vmem [shape: f32[16,128], index: 2, kind: input, shape index: {}]
  %s3 = inlined_call_operand.vmem [shape: f32[1,8,128], index: 3, kind: output, shape index: {}]
  %s4 = sld [smem:[#allocation0]]
  $region30: #{iw_bce_with_logits_loss.1} parent=0
    _
  %s6 = ssub.s32 1, %s4
  %s7 = scalar_select 0, %s6, %s4
  // Predicated region
  $region2: #{iw_bce_with_logits_loss.1} parent=0 // pred_check
    _
  $region3: #{iw_bce_with_logits_loss.1} parent=0 // pred_check_branch
    %9 = sbr.rel (0) target = $region5
  $region4: #{iw_bce_with_logits_loss.1} parent=0 // pred_region
    %s10 = sadd.s32 0, 0
    %s11 = smul.u32 2, %s10
    %p12 = scmp.lt.s32.totalorder %s11, 1
    %s13 = scalar_select %p12, %s11, 1
    %s14 = smul.addr %s13, 8
    %s15 = scalar_lea.vmem %s0, %s14
    %s16 = sadd.s32 0, 0
    %s17 = smul.u32 2, %s16
  $region5: #{iw_bce_with_logits_loss.1} parent=0 // pred_fallthru
    _
  // Predicated region
  $region6: #{iw_bce_with_logits_loss.1} parent=0 // pred_check
    _
  $region7: #{iw_bce_with_logits_loss.1} parent=0 // pred_check_branch
    %19 = sbr.rel (0) target = $region9
  $region8: #{iw_bce_with_logits_loss.1} parent=0 // pred_region
    %s20 = sadd.s32 0, 0
    %s21 = smul.u32 2, %s20
    %p22 = scmp.lt.s32.totalorder %s21, 1
    %s23 = scalar_select %p22, %s21, 1
    %s24 = smul.addr %s23, 8
    %s25 = scalar_lea.vmem %s1, %s24
    %s26 = sadd.s32 0, 0
    %s27 = smul.u32 2, %s26
  $region9: #{iw_bce_with_logits_loss.1} parent=0 // pred_fallthru
    _
  // Predicated region
  $region10: #{iw_bce_with_logits_loss.1} parent=0 // pred_check
    _
  $region11: #{iw_bce_with_logits_loss.1} parent=0 // pred_check_branch
    %29 = sbr.rel (0) target = $region13
  $region12: #{iw_bce_with_logits_loss.1} parent=0 // pred_region
    %s30 = sadd.s32 0, 0
    %s31 = smul.u32 2, %s30
    %p32 = scmp.lt.s32.totalorder %s31, 1
    %s33 = scalar_select %p32, %s31, 1
    %s34 = smul.addr %s33, 8
    %s35 = scalar_lea.vmem %s2, %s34
    %s36 = sadd.s32 0, 0
    %s37 = smul.u32 2, %s36
  $region13: #{iw_bce_with_logits_loss.1} parent=0 // pred_fallthru
    _
  %s38 = sadd.s32 0, 0
  %s39 = smul.u32 2, %s38
  %p40 = scmp.lt.s32.totalorder %s39, 1
  %s41 = scalar_select %p40, %s39, 1
  %s42 = smul.addr %s41, 8
  %s43 = scalar_lea.vmem %s0, %s42
  %s44 = sadd.s32 0, 0
  %s45 = smul.u32 2, %s44
  %p46 = scmp.lt.s32.totalorder %s45, 1
  %s47 = scalar_select %p46, %s45, 1
  %s48 = smul.addr %s47, 8
  %s49 = scalar_lea.vmem %s1, %s48
  %s50 = sadd.s32 0, 0
  %s51 = smul.u32 2, %s50
  %p52 = scmp.lt.s32.totalorder %s51, 1
  %s53 = scalar_select %p52, %s51, 1
  %s54 = smul.addr %s53, 8
  %s55 = scalar_lea.vmem %s2, %s54
  %s56 = sadd.s32 0, 0
  %s57 = smul.u32 2, %s56
  %p58 = scmp.lt.s32.totalorder %s57, 1
  %s59 = scalar_select %p58, %s57, 1
  %s60 = smul.addr %s59, 8
  %s61 = scalar_lea.vmem %s0, %s60
  %s62 = sadd.s32 0, 0
  %s63 = smul.u32 2, %s62
  %s64 = sadd.s32 0, 0
  %s65 = smul.u32 2, %s64
  %p66 = scmp.lt.s32.totalorder %s65, 1
  %s67 = scalar_select %p66, %s65, 1
  %s68 = smul.addr %s67, 8
  %s69 = scalar_lea.vmem %s1, %s68
  %s70 = sadd.s32 0, 0
  %s71 = smul.u32 2, %s70
  %s72 = sadd.s32 0, 0
  %s73 = smul.u32 2, %s72
  %p74 = scmp.lt.s32.totalorder %s73, 1
  %s75 = scalar_select %p74, %s73, 1
  %s76 = smul.addr %s75, 8
  %s77 = scalar_lea.vmem %s2, %s76
  %s78 = sadd.s32 0, 0
  %s79 = smul.u32 2, %s78
  %p80 = scmp.eq.s32.totalorder 0, 0
  // Predicated region
  $region14: #{iw_bce_with_logits_loss.1} parent=0 // pred_check
    %p81 = pneg %p80
  $region15: #{iw_bce_with_logits_loss.1} parent=0 // pred_check_branch
    %83 = sbr.rel (%p81) target = $region17
  $region16: #{iw_bce_with_logits_loss.1} parent=0 // pred_region
    %84 = vst [vmem:[#allocation2] sm:$0xff] 0.0
  $region17: #{iw_bce_with_logits_loss.1} parent=0 // pred_fallthru
    _
  %v85 = vld [vmem:[%s61] sm:$0xff]
  %v86 = vld [vmem:[%s61 + $0x8] sm:$0xff]
  %v87 = vld [vmem:[%s69] sm:$0xff]
  %v88 = vld [vmem:[%s69 + $0x8] sm:$0xff]
  %v89 = vld [vmem:[%s77] sm:$0xff]
  %v90 = vld [vmem:[%s77 + $0x8] sm:$0xff]
  %v91 = vmax.f32 %v85, 0.0
  %v92 = vmax.f32 %v86, 0.0
  %v93 = vmul.f32 %v85, %v87
  %v94 = vmul.f32 %v86, %v88
  %v95 = vsub.f32 %v91, %v93
  %v96 = vsub.f32 %v92, %v94
  %v97 = vand.u32 2147483647, %v85
  %v98 = vand.u32 2147483647, %v86
  %v99 = vsub.f32 0.0, %v97
  %v100 = vsub.f32 0.0, %v98
  %v101 = vmul.f32 %v99, 1.442695
  %v102 = vpow.pop %v101
  %v103 = vmul.f32 %v100, 1.442695
  %v104 = vpow.pop %v103
  %v105 = vadd.f32 %v102, 1.0
  %v106 = vlog2.pop %v105
  %v107 = vmul.f32 %v106, 0.6931472
  %v108 = vmul.f32 -0.5, %v102
  %v109 = vadd.f32 %v108, 1.0
  %v110 = vmul.f32 %v109, %v102
  %v111 = vand.u32 2147483647, %v102
  %vm112 = vcmp.lt.f32.partialorder %v111, 0.0004427343
  %v113 = vsel %vm112, %v110, %v107
  %v114 = vadd.f32 %v104, 1.0
  %v115 = vlog2.pop %v114
  %v116 = vmul.f32 %v115, 0.6931472
  %v117 = vmul.f32 -0.5, %v104
  %v118 = vadd.f32 %v117, 1.0
  %v119 = vmul.f32 %v118, %v104
  %v120 = vand.u32 2147483647, %v104
  %vm121 = vcmp.lt.f32.partialorder %v120, 0.0004427343
  %v122 = vsel %vm121, %v119, %v116
  %v123 = vadd.f32 %v95, %v113
  %v124 = vadd.f32 %v96, %v122
  %v125 = vmul.f32 %v89, %v123
  %v126 = vmul.f32 %v90, %v124
  %v127 = vld [vmem:[#allocation2] sm:$0xff]
  %v128 = vadd.f32 %v125, %v126
  %v129 = vadd.f32 %v127, %v128
  %130 = vst [vmem:[#allocation2] sm:$0xff] %v129
  // Predicated region
  $region18: #{iw_bce_with_logits_loss.1} parent=0 // pred_check
    %p131 = pneg %p80
  $region19: #{iw_bce_with_logits_loss.1} parent=0 // pred_check_branch
    %133 = sbr.rel (%p131) target = $region21
  $region20: #{iw_bce_with_logits_loss.1} parent=0 // pred_region
    %v134 = vld [vmem:[#allocation2] sm:$0xff]
    %135 = vst [vmem:[%s3] sm:$0xff] %v134
  $region21: #{iw_bce_with_logits_loss.1} parent=0 // pred_fallthru
    _
  // Predicated region
  $region22: #{iw_bce_with_logits_loss.1} parent=0 // pred_check
    _
  $region23: #{iw_bce_with_logits_loss.1} parent=0 // pred_check_branch
    %137 = sbr.rel (0) target = $region25
  $region24: #{iw_bce_with_logits_loss.1} parent=0 // pred_region
    _
  $region25: #{iw_bce_with_logits_loss.1} parent=0 // pred_fallthru
    _
  // Predicated region
  $region26: #{iw_bce_with_logits_loss.1} parent=0 // pred_check
    _
  $region27: #{iw_bce_with_logits_loss.1} parent=0 // pred_check_branch
    %139 = sbr.rel (0) target = $region29
  $region28: #{iw_bce_with_logits_loss.1} parent=0 // pred_region
    _
  $region29: #{iw_bce_with_logits_loss.1} parent=0 // pred_fallthru
    _

</llo_original>
